<compile_context>
chip_gen: v6e
topology: v6e:2x2x1
jax: 0.10.0
libtpu: 0.0.40
codegen_flags: <defaults>
</compile_context>

<pallas_src>
import functools

import jax
import jax.numpy as jnp
from jax import lax
from jax.experimental import pallas as pl
from jax.experimental.pallas import tpu as pltpu

HIDDEN = 256
LANE = 128  # lane-dense output padding


def _policy_kernel(x_ref, w1_ref, b1_ref, wh_ref, bh_ref, out_ref, *, n_actions):
    # fc1 + ReLU: (tm, n_state) @ (n_state, 256)
    h = jnp.dot(x_ref[...], w1_ref[...],
                preferred_element_type=jnp.float32) + b1_ref[...]
    h = jnp.maximum(h, 0.0)

    # Fused, lane-padded heads: (tm, 256) @ (256, 128).
    # Columns [0, n_actions) = action logits, column n_actions = value,
    # remaining columns = 0 (zero-padded weights/bias).
    heads = jnp.dot(h, wh_ref[...],
                    preferred_element_type=jnp.float32) + bh_ref[...]

    # Masked softmax over the action lanes only (no in-kernel lane slicing).
    lane_ids = lax.broadcasted_iota(jnp.int32, heads.shape, 1)
    amask = lane_ids < n_actions
    masked = jnp.where(amask, heads, jnp.float32(-jnp.inf))
    m = jnp.max(masked, axis=1, keepdims=True)
    e = jnp.exp(masked - m)                       # exp(-inf) = 0 off-action
    denom = jnp.sum(e, axis=1, keepdims=True)
    probs = e / denom                             # exact division -> rows sum to 1

    # Compose one lane-dense output block: probs where action, heads elsewhere
    # (value column kept, padded columns are exactly 0).
    out_ref[...] = jnp.where(amask, probs, heads)


def prepare_params(params):
    """One-time conversion from torch Linear layout (out,in)/(out,) to kernel layout."""
    n_actions = params["wa"].shape[0]
    n_heads = n_actions + 1

    w1_t = jnp.asarray(params["w1"], jnp.float32).T            # (n_state, 256)
    b1 = jnp.asarray(params["b1"], jnp.float32).reshape(1, -1)  # (1, 256)

    # Fuse action + value heads and zero-pad to a full 128-lane slab.
    wh = jnp.concatenate([jnp.asarray(params["wa"], jnp.float32).T,
                          jnp.asarray(params["wv"], jnp.float32).T], axis=1)
    bh = jnp.concatenate([jnp.asarray(params["ba"], jnp.float32),
                          jnp.asarray(params["bv"], jnp.float32)]).reshape(1, -1)
    npad = max(LANE, ((n_heads + LANE - 1) // LANE) * LANE)
    wh_pad = jnp.zeros((HIDDEN, npad), jnp.float32).at[:, :n_heads].set(wh)
    bh_pad = jnp.zeros((1, npad), jnp.float32).at[:, :n_heads].set(bh)

    prepped = {"w1_t": w1_t, "b1": b1, "wh_pad": wh_pad, "bh_pad": bh_pad}
    return prepped, n_actions


@functools.partial(jax.jit, static_argnames=("n_actions", "block_rows"))
def policy_net_forward(x, prepped, n_actions, block_rows=4096):
    """x: (B, n_state) f32. Returns (act_score (B, n_actions), value (B, 1))."""
    B, n_state = x.shape
    npad = prepped["wh_pad"].shape[1]

    # Batch tile: single step whenever B fits (per-step pipeline overhead
    # dominates at these sizes).  When tiling is genuinely needed, round the
    # tile count up to an even number so v7x's two TensorCores stay balanced.
    if B <= block_rows:
        tm = B
    else:
        num_tiles = pl.cdiv(B, block_rows)
        num_tiles += num_tiles % 2
        tm = ((pl.cdiv(B, num_tiles) + 7) // 8) * 8
    grid = (pl.cdiv(B, tm),)

    resident = lambda i: (0, 0)  # weights/biases: same block every step

    out = pl.pallas_call(
        functools.partial(_policy_kernel, n_actions=n_actions),
        out_shape=jax.ShapeDtypeStruct((B, npad), jnp.float32),
        grid=grid,
        in_specs=[
            pl.BlockSpec((tm, n_state), lambda i: (i, 0)),   # x tile
            pl.BlockSpec((n_state, HIDDEN), resident),       # w1^T
            pl.BlockSpec((1, HIDDEN), resident),             # b1
            pl.BlockSpec((HIDDEN, npad), resident),          # fused, padded head W
            pl.BlockSpec((1, npad), resident),               # fused, padded head b
        ],
        out_specs=pl.BlockSpec((tm, npad), lambda i: (i, 0)),
        compiler_params=pltpu.CompilerParams(
            dimension_semantics=("parallel",),   # megacore sharding on v7x
        ),
    )(x, prepped["w1_t"], prepped["b1"], prepped["wh_pad"], prepped["bh_pad"])

    act_score = out[:, :n_actions]
    value = out[:, n_actions:n_actions + 1]
    return act_score, value


def init_params(key, n_state, n_actions, hidden=HIDDEN):
    """Deterministic synthetic init, torch-Linear layout: W (out, in), b (out,)."""
    ks = jax.random.split(key, 6)

    def u(k, shape, fan_in):
        bound = 1.0 / jnp.sqrt(fan_in)
        return jax.random.uniform(k, shape, jnp.float32, -bound, bound)

    return {
        "w1": u(ks[0], (hidden, n_state), n_state),
        "b1": u(ks[1], (hidden,), n_state),
        "wa": u(ks[2], (n_actions, hidden), hidden),
        "ba": u(ks[3], (n_actions,), hidden),
        "wv": u(ks[4], (1, hidden), hidden),
        "bv": u(ks[5], (1,), hidden),
    }


def _reference(x, params):
    h = jnp.maximum(x @ params["w1"].T + params["b1"], 0.0)
    ref_act = jax.nn.softmax(h @ params["wa"].T + params["ba"], axis=1)
    ref_val = h @ params["wv"].T + params["bv"]
    return ref_act, ref_val


if __name__ == "__main__":
    key = jax.random.PRNGKey(0)
    k_x, k_x2, k_p = jax.random.split(key, 3)

    n_state, n_actions = 4, 2  # CartPole-like sizes
    params = init_params(k_p, n_state, n_actions)
    prepped, n_act = prepare_params(params)

    # --- Small-batch case (single grid step, full-dim batch block) ---
    B = 2
    x = jax.random.normal(k_x, (B, n_state), jnp.float32)
    act_score, value = policy_net_forward(x, prepped, n_act)
    jax.block_until_ready((act_score, value))

    ref_act, ref_val = _reference(x, params)
    assert act_score.shape == (B, n_actions) and value.shape == (B, 1)
    assert jnp.allclose(act_score, ref_act, atol=1e-5)
    assert jnp.allclose(value, ref_val, atol=1e-4)
    assert jnp.allclose(jnp.sum(act_score, axis=1), 1.0, atol=1e-5)

    # --- Exercise the gridded path (small block_rows forces multiple tiles,
    #     including a partial last tile) ---
    B2 = 20
    x2 = jax.random.normal(k_x2, (B2, n_state), jnp.float32)
    act2, val2 = policy_net_forward(x2, prepped, n_act, block_rows=8)
    jax.block_until_ready((act2, val2))

    ref_act2, ref_val2 = _reference(x2, params)
    assert act2.shape == (B2, n_actions) and val2.shape == (B2, 1)
    assert jnp.allclose(act2, ref_act2, atol=1e-5)
    assert jnp.allclose(val2, ref_val2, atol=1e-4)
    assert jnp.allclose(jnp.sum(act2, axis=1), 1.0, atol=1e-5)

    print("KERNEL_OK")
</pallas_src>

<mosaic_0001>
module attributes {stable_mosaic.version = 11 : i64} {
  func.func @_policy_kernel(%arg0: i32, %arg1: memref<2x4xf32, #tpu.memory_space<vmem>>, %arg2: memref<4x256xf32, #tpu.memory_space<vmem>>, %arg3: memref<1x256xf32, #tpu.memory_space<vmem>>, %arg4: memref<256x128xf32, #tpu.memory_space<vmem>>, %arg5: memref<1x128xf32, #tpu.memory_space<vmem>>, %arg6: memref<2x128xf32, #tpu.memory_space<vmem>>) attributes {dimension_semantics = [#tpu.dimension_semantics<parallel>], iteration_bounds = array<i64: 1>, scalar_prefetch = 0 : i64, scratch_operands = 0 : i64, tpu.core_type = #tpu.core_type<tc>, window_params = [{transform_indices = @transform_0, window_bounds = array<i64: 2, 4>}, {pipeline_mode = #tpu.pipeline_mode<synchronous>, transform_indices = @transform_1, window_bounds = array<i64: 4, 256>}, {pipeline_mode = #tpu.pipeline_mode<synchronous>, transform_indices = @transform_2, window_bounds = array<i64: 1, 256>}, {pipeline_mode = #tpu.pipeline_mode<synchronous>, transform_indices = @transform_3, window_bounds = array<i64: 256, 128>}, {pipeline_mode = #tpu.pipeline_mode<synchronous>, transform_indices = @transform_4, window_bounds = array<i64: 1, 128>}, {transform_indices = @transform_5, window_bounds = array<i64: 2, 128>}]} {
    %c0 = arith.constant 0 : index
    %c0_0 = arith.constant 0 : index
    %0 = vector.load %arg1[%c0, %c0_0] : memref<2x4xf32, #tpu.memory_space<vmem>>, vector<2x4xf32>
    %c0_1 = arith.constant 0 : index
    %c0_2 = arith.constant 0 : index
    %1 = vector.load %arg2[%c0_1, %c0_2] : memref<4x256xf32, #tpu.memory_space<vmem>>, vector<4x256xf32>
    %cst = arith.constant dense<0.000000e+00> : vector<2x256xf32>
    %2 = tpu.matmul %0, %1, %cst {dimension_numbers = #tpu.dot_dimension_numbers<[1], [0], [0], [1], [0, 0, 1, 1], [], []>} : vector<2x4xf32>, vector<4x256xf32>, vector<2x256xf32> -> vector<2x256xf32>
    %c0_3 = arith.constant 0 : index
    %c0_4 = arith.constant 0 : index
    %3 = vector.load %arg3[%c0_3, %c0_4] : memref<1x256xf32, #tpu.memory_space<vmem>>, vector<1x256xf32>
    %4 = vector.broadcast %3 : vector<1x256xf32> to vector<2x256xf32>
    %5 = arith.addf %2, %4 : vector<2x256xf32>
    %cst_5 = arith.constant 0.000000e+00 : f32
    %6 = vector.broadcast %cst_5 : f32 to vector<2x256xf32>
    %7 = arith.maximumf %5, %6 : vector<2x256xf32>
    %c0_6 = arith.constant 0 : index
    %c0_7 = arith.constant 0 : index
    %8 = vector.load %arg4[%c0_6, %c0_7] : memref<256x128xf32, #tpu.memory_space<vmem>>, vector<256x128xf32>
    %cst_8 = arith.constant dense<0.000000e+00> : vector<2x128xf32>
    %9 = tpu.matmul %7, %8, %cst_8 {dimension_numbers = #tpu.dot_dimension_numbers<[1], [0], [0], [1], [0, 0, 1, 1], [], []>} : vector<2x256xf32>, vector<256x128xf32>, vector<2x128xf32> -> vector<2x128xf32>
    %c0_9 = arith.constant 0 : index
    %c0_10 = arith.constant 0 : index
    %10 = vector.load %arg5[%c0_9, %c0_10] : memref<1x128xf32, #tpu.memory_space<vmem>>, vector<1x128xf32>
    %11 = vector.broadcast %10 : vector<1x128xf32> to vector<2x128xf32>
    %12 = arith.addf %9, %11 : vector<2x128xf32>
    %13 = tpu.iota {dimensions = array<i32: 1>} : vector<2x128xi32>
    %c2_i32 = arith.constant 2 : i32
    %14 = vector.broadcast %c2_i32 : i32 to vector<2x128xi32>
    %15 = arith.cmpi slt, %13, %14 : vector<2x128xi32>
    %cst_11 = arith.constant 0xFF800000 : f32
    %16 = vector.broadcast %cst_11 : f32 to vector<2x128xf32>
    %17 = arith.select %15, %12, %16 : vector<2x128xi1>, vector<2x128xf32>
    %cst_12 = arith.constant dense<0xFF800000> : vector<2xf32>
    %18 = vector.multi_reduction <maximumf>, %17, %cst_12 [1] : vector<2x128xf32> to vector<2xf32>
    %19 = vector.shape_cast %18 : vector<2xf32> to vector<2x1xf32>
    %20 = vector.broadcast %19 : vector<2x1xf32> to vector<2x128xf32>
    %21 = arith.subf %17, %20 : vector<2x128xf32>
    %22 = math.exp %21 : vector<2x128xf32>
    %cst_13 = arith.constant dense<0.000000e+00> : vector<2xf32>
    %23 = vector.multi_reduction <add>, %22, %cst_13 [1] : vector<2x128xf32> to vector<2xf32>
    %24 = vector.shape_cast %23 : vector<2xf32> to vector<2x1xf32>
    %25 = vector.broadcast %24 : vector<2x1xf32> to vector<2x128xf32>
    %26 = arith.divf %22, %25 : vector<2x128xf32>
    %27 = arith.select %15, %26, %12 : vector<2x128xi1>, vector<2x128xf32>
    %c0_14 = arith.constant 0 : index
    %c0_15 = arith.constant 0 : index
    %28 = vector.load %arg6[%c0_14, %c0_15] : memref<2x128xf32, #tpu.memory_space<vmem>>, vector<2x128xf32>
    tpu.vector_store %arg6[%c0_14, %c0_15], %27 {strides = array<i32>} : memref<2x128xf32, #tpu.memory_space<vmem>>, vector<2x128xf32>,
    return
  }
  func.func @transform_0(%arg0: i32) -> (i32, i32) {
    %c0_i32 = arith.constant 0 : i32
    %c0_i32_0 = arith.constant 0 : i32
    return %arg0, %c0_i32 : i32, i32
  }
  func.func @transform_1(%arg0: i32) -> (i32, i32) {
    %c0_i32 = arith.constant 0 : i32
    %c0_i32_0 = arith.constant 0 : i32
    %c0_i32_1 = arith.constant 0 : i32
    return %c0_i32, %c0_i32_0 : i32, i32
  }
  func.func @transform_2(%arg0: i32) -> (i32, i32) {
    %c0_i32 = arith.constant 0 : i32
    %c0_i32_0 = arith.constant 0 : i32
    %c0_i32_1 = arith.constant 0 : i32
    return %c0_i32, %c0_i32_0 : i32, i32
  }
  func.func @transform_3(%arg0: i32) -> (i32, i32) {
    %c0_i32 = arith.constant 0 : i32
    %c0_i32_0 = arith.constant 0 : i32
    %c0_i32_1 = arith.constant 0 : i32
    return %c0_i32, %c0_i32_0 : i32, i32
  }
  func.func @transform_4(%arg0: i32) -> (i32, i32) {
    %c0_i32 = arith.constant 0 : i32
    %c0_i32_0 = arith.constant 0 : i32
    %c0_i32_1 = arith.constant 0 : i32
    return %c0_i32, %c0_i32_0 : i32, i32
  }
  func.func @transform_5(%arg0: i32) -> (i32, i32) {
    %c0_i32 = arith.constant 0 : i32
    %c0_i32_0 = arith.constant 0 : i32
    return %arg0, %c0_i32 : i32, i32
  }
}

</mosaic_0001>

<llo_original>
// kernel: policy_net_forward.1
$region0: #{policy_net_forward.1}
  #allocation0 [shape = 'u32[]', space=smem, size = 0x4, offset = 0x4, fixed_abs, tag = 'smem constant byte address 0x4 - core index']
  #allocation1 [shape = 'u32[144,128]{1,0:T(1,128)}', space=vmem, size = 0x12000, scoped, tag = 'internal scratch']
  %s0 = inlined_call_operand.hbm [shape: f32[2,4], index: 0, kind: input, shape index: {}]
  %s1 = inlined_call_operand.hbm [shape: f32[4,256], index: 1, kind: input, shape index: {}]
  %s2 = inlined_call_operand.hbm [shape: f32[1,256], index: 2, kind: input, shape index: {}]
  %s3 = inlined_call_operand.hbm [shape: f32[256,128], index: 3, kind: input, shape index: {}]
  %s4 = inlined_call_operand.vmem [shape: f32[1,128], index: 4, kind: input, shape index: {}]
  %s5 = inlined_call_operand.vmem [shape: f32[2,128], index: 5, kind: output, shape index: {}]
  %s6 = sld [smem:[#allocation0]]
  $region46: #{policy_net_forward.1} parent=0
    _
  %s8 = ssub.s32 1, %s6
  %s9 = scalar_select 0, %s8, %s6
  $region1: #{policy_net_forward.1} parent=0
    #allocation2 [shape = 'u8[1024]{0}', space=vmem, size = 0x400, scoped, tag = 'input window, operand 0, single buffered']
    #allocation3 [shape = 's32[1]{0}', space=sflag, size = 0x4, scoped, tag = 'scoped memory for policy_net_forward.1']
    #allocation4 [shape = 'u8[4096]{0}', space=vmem, size = 0x1000, scoped, tag = 'input window, operand 1, single buffered']
    #allocation5 [shape = 's32[1]{0}', space=sflag, size = 0x4, scoped, tag = 'scoped memory for policy_net_forward.1']
    #allocation6 [shape = 'u8[1024]{0}', space=vmem, size = 0x400, scoped, tag = 'input window, operand 2, single buffered']
    #allocation7 [shape = 'u8[131072]{0}', space=vmem, size = 0x20000, scoped, tag = 'input window, operand 3, single buffered']
    #allocation8 [shape = 's32[1]{0}', space=sflag, size = 0x4, scoped, tag = 'scoped memory for policy_net_forward.1']
    %10 = vsyncpa [#allocation3], 0
    %11 = vsyncpa [#allocation5], 0
    %12 = vsyncpa [#allocation8], 0
    // Predicated region
    $region2: #{policy_net_forward.1} parent=1 // pred_check
      _
    $region3: #{policy_net_forward.1} parent=1 // pred_check_branch
      %14 = sbr.rel (0) target = $region5
    $region4: #{policy_net_forward.1} parent=1 // pred_region
      %s16 = ssub.s32 32, 32
      %17 = vsyncadd [#allocation3], %s16
      %s19 = sshll.u32 [#allocation2], 4
      %s20 = int_to_ptr.vmem [resolvable:$true] %s19
      %22 = dma.hbm_to_vmem [thread:$0]  %s0, 32, %s20, [#allocation3]
    $region5: #{policy_net_forward.1} parent=1 // pred_fallthru
      _
    // Predicated region
    $region6: #{policy_net_forward.1} parent=1 // pred_check
      _
    $region7: #{policy_net_forward.1} parent=1 // pred_check_branch
      %24 = sbr.rel (0) target = $region9
    $region8: #{policy_net_forward.1} parent=1 // pred_region
      %s26 = ssub.s32 128, 128
      %27 = vsyncadd [#allocation5], %s26
      %s29 = sshll.u32 [#allocation4], 4
      %s30 = int_to_ptr.vmem [resolvable:$true] %s29
      %32 = dma.hbm_to_vmem [thread:$0]  %s1, 128, %s30, [#allocation5]
    $region9: #{policy_net_forward.1} parent=1 // pred_fallthru
      _
    // Predicated region
    $region10: #{policy_net_forward.1} parent=1 // pred_check
      _
    $region11: #{policy_net_forward.1} parent=1 // pred_check_branch
      %34 = sbr.rel (0) target = $region13
    $region12: #{policy_net_forward.1} parent=1 // pred_region
      %s36 = ssub.s32 32, 32
      %37 = vsyncadd [#allocation5], %s36
      %s39 = sshll.u32 [#allocation6], 4
      %s40 = int_to_ptr.vmem [resolvable:$true] %s39
      %42 = dma.hbm_to_vmem [thread:$0]  %s2, 32, %s40, [#allocation5]
    $region13: #{policy_net_forward.1} parent=1 // pred_fallthru
      _
    // Predicated region
    $region14: #{policy_net_forward.1} parent=1 // pred_check
      _
    $region15: #{policy_net_forward.1} parent=1 // pred_check_branch
      %44 = sbr.rel (0) target = $region17
    $region16: #{policy_net_forward.1} parent=1 // pred_region
      %s46 = ssub.s32 4096, 4096
      %47 = vsyncadd [#allocation8], %s46
      %s48 = sshll.u32 [#allocation7], 4
      %s49 = int_to_ptr.vmem [resolvable:$true] %s48
      %54 = dma.hbm_to_vmem [thread:$0]  %s3, 4096, %s49, [#allocation8], 128, 128, 8
    $region17: #{policy_net_forward.1} parent=1 // pred_fallthru
      _
    // Predicated region
    $region18: #{policy_net_forward.1} parent=1 // pred_check
      _
    $region19: #{policy_net_forward.1} parent=1 // pred_check_branch
      %56 = sbr.rel (0) target = $region21
    $region20: #{policy_net_forward.1} parent=1 // pred_region
      _
    $region21: #{policy_net_forward.1} parent=1 // pred_fallthru
      _
    // Predicated region
    $region22: #{policy_net_forward.1} parent=1 // pred_check
      _
    $region23: #{policy_net_forward.1} parent=1 // pred_check_branch
      %58 = sbr.rel (0) target = $region25
    $region24: #{policy_net_forward.1} parent=1 // pred_region
      %59 = dma.done [#allocation3], 32
    $region25: #{policy_net_forward.1} parent=1 // pred_fallthru
      _
    // Predicated region
    $region26: #{policy_net_forward.1} parent=1 // pred_check
      _
    $region27: #{policy_net_forward.1} parent=1 // pred_check_branch
      %61 = sbr.rel (0) target = $region29
    $region28: #{policy_net_forward.1} parent=1 // pred_region
      %62 = dma.done [#allocation5], 128
    $region29: #{policy_net_forward.1} parent=1 // pred_fallthru
      _
    // Predicated region
    $region30: #{policy_net_forward.1} parent=1 // pred_check
      _
    $region31: #{policy_net_forward.1} parent=1 // pred_check_branch
      %64 = sbr.rel (0) target = $region33
    $region32: #{policy_net_forward.1} parent=1 // pred_region
      %65 = dma.done [#allocation5], 32
    $region33: #{policy_net_forward.1} parent=1 // pred_fallthru
      _
    // Predicated region
    $region34: #{policy_net_forward.1} parent=1 // pred_check
      _
    $region35: #{policy_net_forward.1} parent=1 // pred_check_branch
      %67 = sbr.rel (0) target = $region37
    $region36: #{policy_net_forward.1} parent=1 // pred_region
      %68 = dma.done [#allocation8], 4096
    $region37: #{policy_net_forward.1} parent=1 // pred_fallthru
      _
    %v69 = vld [vmem:[#allocation2] sm:$0x3]
    %v70 = vld [vmem:[#allocation4] sm:$0xff]
    %v71 = vld [vmem:[#allocation6] sm:$0x3]
    %v73 = vlaneseq
    %v74 = vshrl.u32 %v73, 7
    %v75 = vsub.s32 0, %v74
    %v76 = vrot.slane %v71, %v75
    %v77 = vlaneseq
    %v78 = vshrl.u32 %v77, 7
    %v79 = vsub.s32 1, %v78
    %v80 = vrot.slane %v71, %v79
    %v84 = vcombine.high %v70, %v70
    %vm85 = vcmask 31744
    %v87 = vsel %vm85, %v69, 0
    %vm89 = vcmask 1043456
    %v90 = vsel %vm89, %v70, 0
    %v92 = vsel %vm89, %v84, 0
    %94 = vmatprep.subr.mxu0 0.0
    %95 = vmatpush1.msra.mxu0 0.0
    %96 = vmatprep.subr.mxu0 0.0
    %97 = vmatpush1.msra.mxu0 0.0
    %98 = vmatprep.subr.mxu0 0.0
    %99 = vmatpush1.msra.mxu0 0.0
    %100 = vmatprep.subr.mxu0 0.0
    %101 = vmatpush1.msra.mxu0 0.0
    %102 = vmatprep.subr.mxu0 0.0
    %103 = vmatpush1.msra.mxu0 0.0
    %104 = vmatprep.subr.mxu0 0.0
    %105 = vmatpush1.msra.mxu0 0.0
    %106 = vmatprep.subr.mxu0 0.0
    %107 = vmatpush1.msra.mxu0 0.0
    %108 = vmatprep.subr.mxu0 0.0
    %109 = vmatpush1.msra.mxu0 0.0
    %110 = vmatprep.subr.mxu0 0.0
    %111 = vmatpush1.msra.mxu0 0.0
    %112 = vmatprep.subr.mxu0 0.0
    %113 = vmatpush1.msra.mxu0 0.0
    %114 = vmatprep.subr.mxu0 0.0
    %115 = vmatpush1.msra.mxu0 0.0
    %116 = vmatprep.subr.mxu0 0.0
    %117 = vmatpush1.msra.mxu0 0.0
    %118 = vmatprep.subr.mxu0 0.0
    %119 = vmatpush1.msra.mxu0 0.0
    %120 = vmatprep.subr.mxu0 0.0
    %121 = vmatpush1.msra.mxu0 0.0
    %122 = vmatprep.subr.mxu0 0.0
    %123 = vmatpush1.msra.mxu0 0.0
    %124 = vmatprep.subr.mxu0 %v92
    %125 = vmatpush1.msra.mxu0 %v90
    %126 = vmatprep.subr.mxu0 0.0
    %127 = vmatpush2.msra.mxu0 0.0
    %128 = vmatprep.subr.mxu0 0.0
    %129 = vmatpush2.msra.mxu0 0.0
    %130 = vmatprep.subr.mxu0 0.0
    %131 = vmatpush2.msra.mxu0 0.0
    %132 = vmatprep.subr.mxu0 0.0
    %133 = vmatpush2.msra.mxu0 0.0
    %134 = vmatprep.subr.mxu0 0.0
    %135 = vmatpush2.msra.mxu0 0.0
    %136 = vmatprep.subr.mxu0 0.0
    %137 = vmatpush2.msra.mxu0 0.0
    %138 = vmatprep.subr.mxu0 0.0
    %139 = vmatpush2.msra.mxu0 0.0
    %140 = vmatprep.subr.mxu0 0.0
    %141 = vmatpush2.msra.mxu0 0.0
    %142 = vmatprep.subr.mxu0 0.0
    %143 = vmatpush2.msra.mxu0 0.0
    %144 = vmatprep.subr.mxu0 0.0
    %145 = vmatpush2.msra.mxu0 0.0
    %146 = vmatprep.subr.mxu0 0.0
    %147 = vmatpush2.msra.mxu0 0.0
    %148 = vmatprep.subr.mxu0 0.0
    %149 = vmatpush2.msra.mxu0 0.0
    %150 = vmatprep.subr.mxu0 0.0
    %151 = vmatpush2.msra.mxu0 0.0
    %152 = vmatprep.subr.mxu0 0.0
    %153 = vmatpush2.msra.mxu0 0.0
    %154 = vmatprep.subr.mxu0 0.0
    %155 = vmatpush2.msra.mxu0 0.0
    %156 = vmatprep.subr.mxu0 0.0
    %157 = vmatpush2.msra.mxu0 0.0
    %158 = vmatprep.mubr.f32.mxu0 0.0
    %159 = vmatmul.mubr.f32.gmra.mxu0 %v87
    %v160 = vpop.f32.mrf.mxu0
    %v161 = vadd.f32 %v76, %v160
    %v162 = vpop.f32.mrf.mxu0
    %v163 = vadd.f32 %v80, %v162
    %164 = vdwg.mxu0
    %v165 = vmax.f32 %v161, 0.0
    %v166 = vmax.f32 %v163, 0.0
    %v167 = vld [vmem:[#allocation7] sm:$0xff]
    %v168 = vld [vmem:[#allocation7 + $0x8] sm:$0xff]
    %v169 = vld [vmem:[#allocation7 + $0x10] sm:$0xff]
    %v170 = vld [vmem:[#allocation7 + $0x18] sm:$0xff]
    %v171 = vld [vmem:[#allocation7 + $0x20] sm:$0xff]
    %v172 = vld [vmem:[#allocation7 + $0x28] sm:$0xff]
    %v173 = vld [vmem:[#allocation7 + $0x30] sm:$0xff]
    %v174 = vld [vmem:[#allocation7 + $0x38] sm:$0xff]
    %v175 = vld [vmem:[#allocation7 + $0x40] sm:$0xff]
    %v176 = vld [vmem:[#allocation7 + $0x48] sm:$0xff]
    %v177 = vld [vmem:[#allocation7 + $0x50] sm:$0xff]
    %v178 = vld [vmem:[#allocation7 + $0x58] sm:$0xff]
    %v179 = vld [vmem:[#allocation7 + $0x60] sm:$0xff]
    %v180 = vld [vmem:[#allocation7 + $0x68] sm:$0xff]
    %v181 = vld [vmem:[#allocation7 + $0x70] sm:$0xff]
    %v182 = vld [vmem:[#allocation7 + $0x78] sm:$0xff]
    %v183 = vld [vmem:[#allocation7 + $0x80] sm:$0xff]
    %v184 = vld [vmem:[#allocation7 + $0x88] sm:$0xff]
    %v185 = vld [vmem:[#allocation7 + $0x90] sm:$0xff]
    %v186 = vld [vmem:[#allocation7 + $0x98] sm:$0xff]
    %v187 = vld [vmem:[#allocation7 + $0xa0] sm:$0xff]
    %v188 = vld [vmem:[#allocation7 + $0xa8] sm:$0xff]
    %v189 = vld [vmem:[#allocation7 + $0xb0] sm:$0xff]
    %v190 = vld [vmem:[#allocation7 + $0xb8] sm:$0xff]
    %v191 = vld [vmem:[#allocation7 + $0xc0] sm:$0xff]
    %v192 = vld [vmem:[#allocation7 + $0xc8] sm:$0xff]
    %v193 = vld [vmem:[#allocation7 + $0xd0] sm:$0xff]
    %v194 = vld [vmem:[#allocation7 + $0xd8] sm:$0xff]
    %v195 = vld [vmem:[#allocation7 + $0xe0] sm:$0xff]
    %v196 = vld [vmem:[#allocation7 + $0xe8] sm:$0xff]
    %v197 = vld [vmem:[#allocation7 + $0xf0] sm:$0xff]
    %v198 = vld [vmem:[#allocation7 + $0xf8] sm:$0xff]
    %v199 = vld [vmem:[%s4] sm:$0x1]
    %v201 = vlaneseq
    %v202 = vshrl.u32 %v201, 7
    %v203 = vsub.s32 0, %v202
    %v204 = vrot.slane %v199, %v203
    %206 = vmatprep.subr.mxu0 0.0
    %207 = vmatpush1.msra.mxu0 %v182
    %208 = vmatprep.subr.mxu0 0.0
    %209 = vmatpush1.msra.mxu0 %v181
    %210 = vmatprep.subr.mxu0 0.0
    %211 = vmatpush1.msra.mxu0 %v180
    %212 = vmatprep.subr.mxu0 0.0
    %213 = vmatpush1.msra.mxu0 %v179
    %214 = vmatprep.subr.mxu0 0.0
    %215 = vmatpush1.msra.mxu0 %v178
    %216 = vmatprep.subr.mxu0 0.0
    %217 = vmatpush1.msra.mxu0 %v177
    %218 = vmatprep.subr.mxu0 0.0
    %219 = vmatpush1.msra.mxu0 %v176
    %220 = vmatprep.subr.mxu0 0.0
    %221 = vmatpush1.msra.mxu0 %v175
    %222 = vmatprep.subr.mxu0 0.0
    %223 = vmatpush1.msra.mxu0 %v174
    %224 = vmatprep.subr.mxu0 0.0
    %225 = vmatpush1.msra.mxu0 %v173
    %226 = vmatprep.subr.mxu0 0.0
    %227 = vmatpush1.msra.mxu0 %v172
    %228 = vmatprep.subr.mxu0 0.0
    %229 = vmatpush1.msra.mxu0 %v171
    %230 = vmatprep.subr.mxu0 0.0
    %231 = vmatpush1.msra.mxu0 %v170
    %232 = vmatprep.subr.mxu0 0.0
    %233 = vmatpush1.msra.mxu0 %v169
    %234 = vmatprep.subr.mxu0 0.0
    %235 = vmatpush1.msra.mxu0 %v168
    %236 = vmatprep.subr.mxu0 0.0
    %237 = vmatpush1.msra.mxu0 %v167
    %238 = vmatprep.subr.mxu0 0.0
    %239 = vmatpush2.msra.mxu0 %v198
    %240 = vmatprep.subr.mxu0 0.0
    %241 = vmatpush2.msra.mxu0 %v197
    %242 = vmatprep.subr.mxu0 0.0
    %243 = vmatpush2.msra.mxu0 %v196
    %244 = vmatprep.subr.mxu0 0.0
    %245 = vmatpush2.msra.mxu0 %v195
    %246 = vmatprep.subr.mxu0 0.0
    %247 = vmatpush2.msra.mxu0 %v194
    %248 = vmatprep.subr.mxu0 0.0
    %249 = vmatpush2.msra.mxu0 %v193
    %250 = vmatprep.subr.mxu0 0.0
    %251 = vmatpush2.msra.mxu0 %v192
    %252 = vmatprep.subr.mxu0 0.0
    %253 = vmatpush2.msra.mxu0 %v191
    %254 = vmatprep.subr.mxu0 0.0
    %255 = vmatpush2.msra.mxu0 %v190
    %256 = vmatprep.subr.mxu0 0.0
    %257 = vmatpush2.msra.mxu0 %v189
    %258 = vmatprep.subr.mxu0 0.0
    %259 = vmatpush2.msra.mxu0 %v188
    %260 = vmatprep.subr.mxu0 0.0
    %261 = vmatpush2.msra.mxu0 %v187
    %262 = vmatprep.subr.mxu0 0.0
    %263 = vmatpush2.msra.mxu0 %v186
    %264 = vmatprep.subr.mxu0 0.0
    %265 = vmatpush2.msra.mxu0 %v185
    %266 = vmatprep.subr.mxu0 0.0
    %267 = vmatpush2.msra.mxu0 %v184
    %268 = vmatprep.subr.mxu0 0.0
    %269 = vmatpush2.msra.mxu0 %v183
    %270 = vmatprep.mubr.f32.mxu0 %v166
    %271 = vmatmul.mubr.f32.gmra.mxu0 %v165
    %v272 = vpop.f32.mrf.mxu0
    %v273 = vadd.f32 %v204, %v272
    %v274 = vpop.f32.mrf.mxu0
    %275 = vdwg.mxu0
    %v276 = vlaneseq
    %v277 = vand.u32 %v276, 127
    %vm278 = vcmp.lt.s32.totalorder %v277, 2
    %v279 = vsel %vm278, %v273, -inf
    %vm280 = vcmask 1041408
    %v281 = vsel %vm280, %v279, -inf
    %282 = vmax.xlane.f32.xlu0 %v281
    %v283 = vpop.xlane.xlu0 %282
    %v284 = vsub.f32 %v279, %v283
    %v285 = vmul.f32 %v284, 1.442695
    %v286 = vpow.pop %v285
    %v287 = vsel %vm280, %v286, 0.0
    %288 = vadd.xlane.f32.xlu0 %v287
    %v289 = vpop.xlane.xlu0 %288
    %v290 = vrcp.pop %v289
    %v291 = vmul.f32 %v286, %v290
    %v292 = vsel %vm278, %v291, %v273
    %293 = vst [vmem:[%s5] sm:$0x3] %v292
    // Predicated region
    $region38: #{policy_net_forward.1} parent=1 // pred_check
      _
    $region39: #{policy_net_forward.1} parent=1 // pred_check_branch
      %295 = sbr.rel (0) target = $region41
    $region40: #{policy_net_forward.1} parent=1 // pred_region
      _
    $region41: #{policy_net_forward.1} parent=1 // pred_fallthru
      _
    // Predicated region
    $region42: #{policy_net_forward.1} parent=1 // pred_check
      _
    $region43: #{policy_net_forward.1} parent=1 // pred_check_branch
      %297 = sbr.rel (0) target = $region45
    $region44: #{policy_net_forward.1} parent=1 // pred_region
      _
    $region45: #{policy_net_forward.1} parent=1 // pred_fallthru
      _
    %298 = vsyncpa [#allocation3], 1
    %299 = vsyncpa [#allocation5], 1
    %300 = vsyncpa [#allocation8], 1

</llo_original>
